<compile_context>
chip_gen: v5e
topology: v5e:2x2
jax: 0.10.0
libtpu: 0.0.40
codegen_flags: <defaults>
</compile_context>

<pallas_src>
import functools

import jax
import jax.numpy as jnp
from jax.experimental import pallas as pl
from jax.experimental.pallas import tpu as pltpu

EPS = 1e-5
_LANES = 128
_PER_STEP_VMEM_BUDGET = 12 << 20   # dbl-buffered I/O + f32 intermediates per grid step
_MIN_GRID_STEPS = 8                # keep both v7x TensorCores busy
_F32_TEMPS = 4                     # x_f32, x*x, norm, y (upper bound)


def _round_up(n, m):
    return ((n + m - 1) // m) * m


def _sublane_multiple(dtype):
    # 8 for f32, 16 for bf16/f16, 32 for int8/fp8 (keep packed sublanes full).
    return max(8, 32 // jnp.dtype(dtype).itemsize)


def _normalize_rows(x_f32, x_raw, s1, s2, d, scale, shift, out_dtype):
    inv_d = 1.0 / d
    mean = s1 * inv_d
    # One-pass biased variance (matches unbiased=False); clamp guards tiny
    # negative values from cancellation.
    var = jnp.maximum(s2 * inv_d - mean * mean, 0.0)
    inv = jax.lax.rsqrt(var + EPS)     # EUP slot, effectively free
    if jnp.dtype(out_dtype).itemsize == 2:
        # bf16/f16 I/O: keep reductions f32 (above) but do the normalize/affine
        # in the packed dtype -> 2x VPU throughput, one less full-tile f32 temp.
        cd = jnp.dtype(out_dtype)
        y = (x_raw.astype(cd) - mean.astype(cd)) * inv.astype(cd)
        return y * scale.astype(cd) + shift.astype(cd)
    y = (x_f32 - mean) * inv * scale.astype(jnp.float32) + shift.astype(jnp.float32)
    return y.astype(out_dtype)


def _layernorm_kernel(x_ref, scale_ref, shift_ref, o_ref):
    # x_ref: (tile_rows, D) -- one logical row per vector row.
    x_raw = x_ref[...]
    x = x_raw.astype(jnp.float32)
    # Two independent row reductions (overlap on the XLU).
    s1 = jnp.sum(x, axis=-1, keepdims=True)
    s2 = jnp.sum(x * x, axis=-1, keepdims=True)
    o_ref[...] = _normalize_rows(
        x, x_raw, s1, s2, x.shape[-1], scale_ref[...], shift_ref[...], o_ref.dtype)


def _layernorm_lane_dense_kernel(x_ref, scale_ref, shift_ref, seg_ref, o_ref, *, d):
    # x_ref: (tile_rows, 128) where each 128-lane row holds 128//d consecutive
    # logical rows, each in an aligned d-lane segment. Segmented lane sums are
    # broadcast back to every lane of their segment with one MXU matmul each
    # against a block-diagonal ones matrix (MXU is otherwise idle here), so the
    # VPU path and all loads/stores stay fully lane-dense.
    x_raw = x_ref[...]
    x = x_raw.astype(jnp.float32)
    seg = seg_ref[...]                                       # (128, 128) f32
    s1 = jnp.dot(x, seg, preferred_element_type=jnp.float32)
    s2 = jnp.dot(x * x, seg, preferred_element_type=jnp.float32)
    o_ref[...] = _normalize_rows(
        x, x_raw, s1, s2, d, scale_ref[...], shift_ref[...], o_ref.dtype)


def _choose_tile_rows(num_rows, width, dtype):
    itemsize = jnp.dtype(dtype).itemsize
    mult = _sublane_multiple(dtype)
    # Per-row VMEM cost: 2x double-buffered input + output (I/O dtype) plus
    # ~_F32_TEMPS full-tile f32 intermediates.
    per_row = width * (4 * itemsize + _F32_TEMPS * 4)
    rows = max(mult, _PER_STEP_VMEM_BUDGET // per_row)
    # Keep >= _MIN_GRID_STEPS grid steps when there is enough work so the
    # "parallel" grid axis load-balances across v7x's two TensorCores.
    rows = min(rows, _round_up(pl.cdiv(num_rows, _MIN_GRID_STEPS), mult))
    rows = max(mult, (rows // mult) * mult)
    if rows >= num_rows:
        return num_rows                       # single full-extent block
    # Prefer an even step count (2 TCs) when it doesn't shrink the tile much.
    steps = pl.cdiv(num_rows, rows)
    if steps % 2 == 1:
        alt = _round_up(pl.cdiv(num_rows, steps + 1), mult)
        if alt >= mult and pl.cdiv(num_rows, alt) % 2 == 0:
            rows = alt
    return rows


def _vmem_limit_bytes(tile_rows, width, dtype):
    itemsize = jnp.dtype(dtype).itemsize
    io_tile = tile_rows * width * itemsize
    f32_tile = tile_rows * width * 4
    need = 4 * io_tile + _F32_TEMPS * f32_tile + (4 << 20)   # dbl-buf I/O + temps + scratch slack
    try:
        cap = pltpu.get_tpu_info().vmem_capacity_bytes
    except Exception:
        cap = 64 << 20                        # conservative: v7x has the smallest VMEM
    return int(min(max(need, 16 << 20), int(0.6 * cap)))


def layer_norm(x, scale, shift, *, tile_rows=None):
    """x: (..., D); scale, shift: (D,). Returns same shape/dtype as x."""
    orig_shape = x.shape
    D = orig_shape[-1]
    x2 = x.reshape(-1, D)
    R = x2.shape[0]
    dtype = x.dtype
    itemsize = jnp.dtype(dtype).itemsize

    # Lane-dense path for narrow rows (the D < 128 case). Fallback to the
    # straightforward layout when D doesn't divide 128 or R doesn't fold evenly.
    lane_dense = (D < _LANES) and (_LANES % D == 0) and (R % (_LANES // D) == 0)

    if lane_dense:
        rp = _LANES // D
        width = _LANES
        rows = R // rp
        xw = x2.reshape(rows, _LANES)                 # free: contiguous row-major
        scale_w = jnp.tile(scale.reshape(1, D), (1, rp))
        shift_w = jnp.tile(shift.reshape(1, D), (1, rp))
        seg = jnp.kron(jnp.eye(rp, dtype=jnp.float32),
                       jnp.ones((D, D), dtype=jnp.float32))   # (128,128) block-diag ones
        kernel = functools.partial(_layernorm_lane_dense_kernel, d=D)
        extra_inputs = (seg,)
        extra_specs = [pl.BlockSpec((_LANES, _LANES), lambda i: (0, 0))]
    else:
        width = D
        rows = R
        xw = x2
        scale_w = scale.reshape(1, D)
        shift_w = shift.reshape(1, D)
        kernel = _layernorm_kernel
        extra_inputs = ()
        extra_specs = []

    if tile_rows is None:
        tile_rows = _choose_tile_rows(rows, width, dtype)

    # No padding: the partial last block (rows % tile_rows != 0) is safe because
    # each output row depends only on its own input row; out-of-bounds rows are
    # computed on garbage and masked on store by Pallas.
    grid = (pl.cdiv(rows, tile_rows),)

    cost = pl.CostEstimate(
        flops=8 * rows * width,
        transcendentals=rows,
        bytes_accessed=2 * rows * width * itemsize + 2 * D * jnp.dtype(scale.dtype).itemsize,
    )

    out = pl.pallas_call(
        kernel,
        out_shape=jax.ShapeDtypeStruct((rows, width), dtype),
        grid_spec=pltpu.PrefetchScalarGridSpec(
            num_scalar_prefetch=0,
            grid=grid,
            in_specs=[
                pl.BlockSpec((tile_rows, width), lambda i: (i, 0)),
                pl.BlockSpec((1, width), lambda i: (0, 0)),
                pl.BlockSpec((1, width), lambda i: (0, 0)),
            ] + extra_specs,
            out_specs=pl.BlockSpec((tile_rows, width), lambda i: (i, 0)),
        ),
        compiler_params=pltpu.CompilerParams(
            dimension_semantics=("parallel",),
            vmem_limit_bytes=_vmem_limit_bytes(tile_rows, width, dtype),
        ),
        cost_estimate=cost,
    )(xw, scale_w, shift_w, *extra_inputs)

    return out.reshape(orig_shape)


if __name__ == "__main__":
    key = jax.random.PRNGKey(0)
    batch, seq, embed_dim = 2, 8, 32
    x = jax.random.normal(key, (batch, seq, embed_dim), dtype=jnp.float32)

    # Deterministic parameter init (matches nn.Parameter(torch.ones/zeros)).
    scale = jnp.ones((embed_dim,), dtype=jnp.float32)
    shift = jnp.zeros((embed_dim,), dtype=jnp.float32)

    y = layer_norm(x, scale, shift)
    jax.block_until_ready(y)

    # Reference check in plain JAX (matches PyTorch biased-variance LayerNorm).
    mean = x.mean(axis=-1, keepdims=True)
    var = ((x - mean) ** 2).mean(axis=-1, keepdims=True)
    ref = scale * (x - mean) / jnp.sqrt(var + EPS) + shift
    assert jnp.allclose(y, ref, atol=1e-4, rtol=1e-4), "mismatch vs reference"

    print("KERNEL_OK")
</pallas_src>

<mosaic_0001>
module attributes {stable_mosaic.version = 11 : i64} {
  func.func @_layernorm_lane_dense_kernel(%arg0: i32, %arg1: memref<4x128xf32, #tpu.memory_space<vmem>>, %arg2: memref<1x128xf32, #tpu.memory_space<vmem>>, %arg3: memref<1x128xf32, #tpu.memory_space<vmem>>, %arg4: memref<128x128xf32, #tpu.memory_space<vmem>>, %arg5: memref<4x128xf32, #tpu.memory_space<vmem>>) attributes {dimension_semantics = [#tpu.dimension_semantics<parallel>], iteration_bounds = array<i64: 1>, scalar_prefetch = 0 : i64, scratch_operands = 0 : i64, tpu.core_type = #tpu.core_type<tc>, window_params = [{transform_indices = @transform_0, window_bounds = array<i64: 4, 128>}, {pipeline_mode = #tpu.pipeline_mode<synchronous>, transform_indices = @transform_1, window_bounds = array<i64: 1, 128>}, {pipeline_mode = #tpu.pipeline_mode<synchronous>, transform_indices = @transform_2, window_bounds = array<i64: 1, 128>}, {pipeline_mode = #tpu.pipeline_mode<synchronous>, transform_indices = @transform_3, window_bounds = array<i64: 128, 128>}, {transform_indices = @transform_4, window_bounds = array<i64: 4, 128>}]} {
    %c0 = arith.constant 0 : index
    %c0_0 = arith.constant 0 : index
    %0 = vector.load %arg1[%c0, %c0_0] : memref<4x128xf32, #tpu.memory_space<vmem>>, vector<4x128xf32>
    %c0_1 = arith.constant 0 : index
    %c0_2 = arith.constant 0 : index
    %1 = vector.load %arg4[%c0_1, %c0_2] : memref<128x128xf32, #tpu.memory_space<vmem>>, vector<128x128xf32>
    %cst = arith.constant dense<0.000000e+00> : vector<4x128xf32>
    %2 = tpu.matmul %0, %1, %cst {dimension_numbers = #tpu.dot_dimension_numbers<[1], [0], [0], [1], [0, 0, 1, 1], [], []>} : vector<4x128xf32>, vector<128x128xf32>, vector<4x128xf32> -> vector<4x128xf32>
    %3 = arith.mulf %0, %0 : vector<4x128xf32>
    %cst_3 = arith.constant dense<0.000000e+00> : vector<4x128xf32>
    %4 = tpu.matmul %3, %1, %cst_3 {dimension_numbers = #tpu.dot_dimension_numbers<[1], [0], [0], [1], [0, 0, 1, 1], [], []>} : vector<4x128xf32>, vector<128x128xf32>, vector<4x128xf32> -> vector<4x128xf32>
    %c0_4 = arith.constant 0 : index
    %c0_5 = arith.constant 0 : index
    %5 = vector.load %arg2[%c0_4, %c0_5] : memref<1x128xf32, #tpu.memory_space<vmem>>, vector<1x128xf32>
    %c0_6 = arith.constant 0 : index
    %c0_7 = arith.constant 0 : index
    %6 = vector.load %arg3[%c0_6, %c0_7] : memref<1x128xf32, #tpu.memory_space<vmem>>, vector<1x128xf32>
    %cst_8 = arith.constant 3.125000e-02 : f32
    %7 = vector.broadcast %cst_8 : f32 to vector<4x128xf32>
    %8 = arith.mulf %2, %7 : vector<4x128xf32>
    %cst_9 = arith.constant 3.125000e-02 : f32
    %9 = vector.broadcast %cst_9 : f32 to vector<4x128xf32>
    %10 = arith.mulf %4, %9 : vector<4x128xf32>
    %11 = arith.mulf %8, %8 : vector<4x128xf32>
    %12 = arith.subf %10, %11 : vector<4x128xf32>
    %cst_10 = arith.constant 0.000000e+00 : f32
    %13 = vector.broadcast %cst_10 : f32 to vector<4x128xf32>
    %14 = arith.maximumf %12, %13 : vector<4x128xf32>
    %cst_11 = arith.constant 9.99999974E-6 : f32
    %15 = vector.broadcast %cst_11 : f32 to vector<4x128xf32>
    %16 = arith.addf %14, %15 : vector<4x128xf32>
    %17 = math.rsqrt %16 : vector<4x128xf32>
    %18 = arith.subf %0, %8 : vector<4x128xf32>
    %19 = arith.mulf %18, %17 : vector<4x128xf32>
    %20 = vector.broadcast %5 : vector<1x128xf32> to vector<4x128xf32>
    %21 = arith.mulf %19, %20 : vector<4x128xf32>
    %22 = vector.broadcast %6 : vector<1x128xf32> to vector<4x128xf32>
    %23 = arith.addf %21, %22 : vector<4x128xf32>
    %c0_12 = arith.constant 0 : index
    %c0_13 = arith.constant 0 : index
    %24 = vector.load %arg5[%c0_12, %c0_13] : memref<4x128xf32, #tpu.memory_space<vmem>>, vector<4x128xf32>
    tpu.vector_store %arg5[%c0_12, %c0_13], %23 {strides = array<i32>} : memref<4x128xf32, #tpu.memory_space<vmem>>, vector<4x128xf32>,
    return
  }
  func.func @transform_0(%arg0: i32) -> (i32, i32) {
    %c0_i32 = arith.constant 0 : i32
    %c0_i32_0 = arith.constant 0 : i32
    return %arg0, %c0_i32 : i32, i32
  }
  func.func @transform_1(%arg0: i32) -> (i32, i32) {
    %c0_i32 = arith.constant 0 : i32
    %c0_i32_0 = arith.constant 0 : i32
    %c0_i32_1 = arith.constant 0 : i32
    return %c0_i32, %c0_i32_0 : i32, i32
  }
  func.func @transform_2(%arg0: i32) -> (i32, i32) {
    %c0_i32 = arith.constant 0 : i32
    %c0_i32_0 = arith.constant 0 : i32
    %c0_i32_1 = arith.constant 0 : i32
    return %c0_i32, %c0_i32_0 : i32, i32
  }
  func.func @transform_3(%arg0: i32) -> (i32, i32) {
    %c0_i32 = arith.constant 0 : i32
    %c0_i32_0 = arith.constant 0 : i32
    %c0_i32_1 = arith.constant 0 : i32
    return %c0_i32, %c0_i32_0 : i32, i32
  }
  func.func @transform_4(%arg0: i32) -> (i32, i32) {
    %c0_i32 = arith.constant 0 : i32
    %c0_i32_0 = arith.constant 0 : i32
    return %arg0, %c0_i32 : i32, i32
  }
}

</mosaic_0001>

<llo_original>
// kernel: tpu_custom_call.1
$region0: #{tpu_custom_call.1}
  #allocation0 [shape = 'u32[]', space=smem, size = 0x4, offset = 0x4, fixed_abs, tag = 'smem constant byte address 0x4 - core index']
  #allocation1 [shape = 'u32[72,128]{1,0:T(1,128)}', space=vmem, size = 0x9000, scoped, tag = 'internal scratch']
  %s0 = inlined_call_operand.hbm [shape: f32[4,128], index: 0, kind: input, shape index: {}]
  %s1 = inlined_call_operand.hbm [shape: f32[1,128], index: 1, kind: input, shape index: {}]
  %s2 = inlined_call_operand.vmem [shape: f32[1,128], index: 2, kind: input, shape index: {}]
  %s3 = inlined_call_operand.hbm [shape: f32[128,128], index: 3, kind: input, shape index: {}]
  %s4 = inlined_call_operand.hbm [shape: f32[4,128], index: 4, kind: output, shape index: {}]
  %s5 = sld [smem:[#allocation0]]
  $region38: #{tpu_custom_call.1} parent=0
    _
  %s7 = ssub.s32 1, %s5
  %s8 = scalar_select 0, %s7, %s5
  $region1: #{tpu_custom_call.1} parent=0
    #allocation2 [shape = 'u8[2048]{0}', space=vmem, size = 0x800, scoped, tag = 'input window, operand 0, single buffered']
    #allocation3 [shape = 's32[1]{0}', space=sflag, size = 0x4, scoped, tag = 'scoped memory for tpu_custom_call.1']
    #allocation4 [shape = 's32[1]{0}', space=sflag, size = 0x4, scoped, tag = 'scoped memory for tpu_custom_call.1']
    #allocation5 [shape = 'u8[512]{0}', space=vmem, size = 0x400, scoped, tag = 'input window, operand 1, single buffered']
    #allocation6 [shape = 's32[1]{0}', space=sflag, size = 0x4, scoped, tag = 'scoped memory for tpu_custom_call.1']
    #allocation7 [shape = 'u8[65536]{0}', space=vmem, size = 0x10000, scoped, tag = 'input window, operand 3, single buffered']
    #allocation8 [shape = 'u8[2048]{0}', space=vmem, size = 0x800, scoped, tag = 'output window, operand 0, single buffered']
    %9 = vsyncpa [#allocation3], 0
    %10 = vsyncpa [#allocation6], 0
    %11 = vsyncpa [#allocation4], 0
    // Predicated region
    $region2: #{tpu_custom_call.1} parent=1 // pred_check
      _
    $region3: #{tpu_custom_call.1} parent=1 // pred_check_branch
      %13 = sbr.rel (0) target = $region5
    $region4: #{tpu_custom_call.1} parent=1 // pred_region
      %15 = vsyncadd [#allocation3], 0
      %s17 = sshll.u32 %s0, 4
      %s18 = int_to_ptr.hbm [resolvable:$true] %s17
      %s19 = sshll.u32 [#allocation2], 4
      %s20 = int_to_ptr.vmem [resolvable:$true] %s19
      %22 = dma.hbm_to_vmem [thread:$0]  %s18, 64, %s20, [#allocation3]
    $region5: #{tpu_custom_call.1} parent=1 // pred_fallthru
      _
    // Predicated region
    $region6: #{tpu_custom_call.1} parent=1 // pred_check
      _
    $region7: #{tpu_custom_call.1} parent=1 // pred_check_branch
      %24 = sbr.rel (0) target = $region9
    $region8: #{tpu_custom_call.1} parent=1 // pred_region
      %26 = vsyncadd [#allocation6], 0
      %s28 = sshll.u32 %s1, 4
      %s29 = int_to_ptr.hbm [resolvable:$true] %s28
      %s30 = sshll.u32 [#allocation5], 4
      %s31 = int_to_ptr.vmem [resolvable:$true] %s30
      %33 = dma.hbm_to_vmem [thread:$0]  %s29, 16, %s31, [#allocation6]
    $region9: #{tpu_custom_call.1} parent=1 // pred_fallthru
      _
    // Predicated region
    $region10: #{tpu_custom_call.1} parent=1 // pred_check
      _
    $region11: #{tpu_custom_call.1} parent=1 // pred_check_branch
      %35 = sbr.rel (0) target = $region13
    $region12: #{tpu_custom_call.1} parent=1 // pred_region
      _
    $region13: #{tpu_custom_call.1} parent=1 // pred_fallthru
      _
    // Predicated region
    $region14: #{tpu_custom_call.1} parent=1 // pred_check
      _
    $region15: #{tpu_custom_call.1} parent=1 // pred_check_branch
      %37 = sbr.rel (0) target = $region17
    $region16: #{tpu_custom_call.1} parent=1 // pred_region
      %39 = vsyncadd [#allocation6], 0
      %s40 = sshll.u32 %s3, 4
      %s41 = int_to_ptr.hbm [resolvable:$true] %s40
      %s42 = sshll.u32 [#allocation7], 4
      %s43 = int_to_ptr.vmem [resolvable:$true] %s42
      %48 = dma.hbm_to_vmem [thread:$0]  %s41, 2048, %s43, [#allocation6], 128, 128, 8
    $region17: #{tpu_custom_call.1} parent=1 // pred_fallthru
      _
    // Predicated region
    $region18: #{tpu_custom_call.1} parent=1 // pred_check
      _
    $region19: #{tpu_custom_call.1} parent=1 // pred_check_branch
      %50 = sbr.rel (0) target = $region21
    $region20: #{tpu_custom_call.1} parent=1 // pred_region
      %52 = dma.done [#allocation3], 64
    $region21: #{tpu_custom_call.1} parent=1 // pred_fallthru
      _
    // Predicated region
    $region22: #{tpu_custom_call.1} parent=1 // pred_check
      _
    $region23: #{tpu_custom_call.1} parent=1 // pred_check_branch
      %54 = sbr.rel (0) target = $region25
    $region24: #{tpu_custom_call.1} parent=1 // pred_region
      %56 = dma.done [#allocation6], 16
    $region25: #{tpu_custom_call.1} parent=1 // pred_fallthru
      _
    // Predicated region
    $region26: #{tpu_custom_call.1} parent=1 // pred_check
      _
    $region27: #{tpu_custom_call.1} parent=1 // pred_check_branch
      %58 = sbr.rel (0) target = $region29
    $region28: #{tpu_custom_call.1} parent=1 // pred_region
      %60 = dma.done [#allocation6], 2048
    $region29: #{tpu_custom_call.1} parent=1 // pred_fallthru
      _
    %v61 = vld [vmem:[#allocation2] sm:$0xf]
    %v62 = vld [vmem:[#allocation7] sm:$0xff]
    %v63 = vld [vmem:[#allocation7 + $0x8] sm:$0xff]
    %v64 = vld [vmem:[#allocation7 + $0x10] sm:$0xff]
    %v65 = vld [vmem:[#allocation7 + $0x18] sm:$0xff]
    %v66 = vld [vmem:[#allocation7 + $0x20] sm:$0xff]
    %v67 = vld [vmem:[#allocation7 + $0x28] sm:$0xff]
    %v68 = vld [vmem:[#allocation7 + $0x30] sm:$0xff]
    %v69 = vld [vmem:[#allocation7 + $0x38] sm:$0xff]
    %v70 = vld [vmem:[#allocation7 + $0x40] sm:$0xff]
    %v71 = vld [vmem:[#allocation7 + $0x48] sm:$0xff]
    %v72 = vld [vmem:[#allocation7 + $0x50] sm:$0xff]
    %v73 = vld [vmem:[#allocation7 + $0x58] sm:$0xff]
    %v74 = vld [vmem:[#allocation7 + $0x60] sm:$0xff]
    %v75 = vld [vmem:[#allocation7 + $0x68] sm:$0xff]
    %v76 = vld [vmem:[#allocation7 + $0x70] sm:$0xff]
    %v77 = vld [vmem:[#allocation7 + $0x78] sm:$0xff]
    %78 = vmatpush.msra.mxu0 %v77
    %79 = vmatpush.msra.mxu0 %v76
    %80 = vmatpush.msra.mxu0 %v75
    %81 = vmatpush.msra.mxu0 %v74
    %82 = vmatpush.msra.mxu0 %v73
    %83 = vmatpush.msra.mxu0 %v72
    %84 = vmatpush.msra.mxu0 %v71
    %85 = vmatpush.msra.mxu0 %v70
    %86 = vmatpush.msra.mxu0 %v69
    %87 = vmatpush.msra.mxu0 %v68
    %88 = vmatpush.msra.mxu0 %v67
    %89 = vmatpush.msra.mxu0 %v66
    %90 = vmatpush.msra.mxu0 %v65
    %91 = vmatpush.msra.mxu0 %v64
    %92 = vmatpush.msra.mxu0 %v63
    %93 = vmatpush.msra.mxu0 %v62
    %94 = vmatmul.f32.gmra.mxu0 %v61
    %v95 = vpop.f32.mrf.mxu0
    %v96 = vadd.f32 0.0, %v95
    %97 = vdwg.mxu0
    %v98 = vmul.f32 %v61, %v61
    %99 = vmatpush.msra.mxu0 %v77
    %100 = vmatpush.msra.mxu0 %v76
    %101 = vmatpush.msra.mxu0 %v75
    %102 = vmatpush.msra.mxu0 %v74
    %103 = vmatpush.msra.mxu0 %v73
    %104 = vmatpush.msra.mxu0 %v72
    %105 = vmatpush.msra.mxu0 %v71
    %106 = vmatpush.msra.mxu0 %v70
    %107 = vmatpush.msra.mxu0 %v69
    %108 = vmatpush.msra.mxu0 %v68
    %109 = vmatpush.msra.mxu0 %v67
    %110 = vmatpush.msra.mxu0 %v66
    %111 = vmatpush.msra.mxu0 %v65
    %112 = vmatpush.msra.mxu0 %v64
    %113 = vmatpush.msra.mxu0 %v63
    %114 = vmatpush.msra.mxu0 %v62
    %115 = vmatmul.f32.gmra.mxu0 %v98
    %v116 = vpop.f32.mrf.mxu0
    %v117 = vadd.f32 0.0, %v116
    %118 = vdwg.mxu0
    %v119 = vld [vmem:[#allocation5] sm:$0x1]
    %v120 = vld [vmem:[%s2] sm:$0x1]
    %v121 = vmul.f32 %v96, 0.03125
    %v122 = vmul.f32 %v117, 0.03125
    %v123 = vmul.f32 %v121, %v121
    %v124 = vsub.f32 %v122, %v123
    %v125 = vmax.f32 %v124, 0.0
    %v126 = vadd.f32 %v125, 1e-05
    %v127 = vrsqrt.pop %v126
    %v128 = vmul.f32 %v127, %v126
    %v129 = vmul.f32 %v128, %v127
    %v130 = vmul.f32 0.5, %v129
    %v131 = vsub.f32 1.5, %v130
    %v132 = vmul.f32 %v127, %v131
    %vm133 = vweird.f32 %v126
    %vm134 = vweird.f32 %v127
    %vm135 = vmor %vm133, %vm134
    %v136 = vsel %vm135, %v127, %v132
    %v137 = vsub.f32 %v61, %v121
    %v138 = vmul.f32 %v137, %v136
    %v140 = vperm.slane %v119, 0
    %v142 = vmul.f32 %v138, %v140
    %v144 = vperm.slane %v120, 0
    %v146 = vadd.f32 %v142, %v144
    %147 = vst [vmem:[#allocation8] sm:$0xf] %v146
    // Predicated region
    $region30: #{tpu_custom_call.1} parent=1 // pred_check
      _
    $region31: #{tpu_custom_call.1} parent=1 // pred_check_branch
      %149 = sbr.rel (0) target = $region33
    $region32: #{tpu_custom_call.1} parent=1 // pred_region
      %151 = vsyncadd [#allocation4], 0
      %s153 = sshll.u32 [#allocation8], 4
      %s154 = int_to_ptr.vmem [resolvable:$true] %s153
      %s155 = sshll.u32 %s4, 4
      %s156 = int_to_ptr.hbm [resolvable:$true] %s155
      %158 = dma.vmem_to_hbm [thread:$0]  %s154, 64, %s156, [#allocation4]
    $region33: #{tpu_custom_call.1} parent=1 // pred_fallthru
      _
    // Predicated region
    $region34: #{tpu_custom_call.1} parent=1 // pred_check
      _
    $region35: #{tpu_custom_call.1} parent=1 // pred_check_branch
      %160 = sbr.rel (0) target = $region37
    $region36: #{tpu_custom_call.1} parent=1 // pred_region
      %162 = dma.done [#allocation4], 64
    $region37: #{tpu_custom_call.1} parent=1 // pred_fallthru
      _
    %163 = vsyncpa [#allocation3], 1
    %164 = vsyncpa [#allocation6], 1
    %165 = vsyncpa [#allocation4], 1

</llo_original>
